<compile_context>
chip_gen: v7x
topology: tpu7x:2x2x1
jax: 0.10.0
libtpu: 0.0.40
codegen_flags: <defaults>
</compile_context>

<pallas_src>
import functools

import jax
import jax.numpy as jnp
from jax.experimental import pallas as pl
from jax.experimental.pallas import tpu as pltpu


IN_FEATURES = 784
OUT_FEATURES = 10
TB_DEFAULT = 2048            # batch tile size; multiple of 8
VMEM_LIMIT_BYTES = 32 << 20  # covers TB=2048 double-buffered on v5e/v6e/v7x


def _linear_kernel(x_ref, w_ref, b_ref, o_ref):
    # x_ref: (TB, 784), w_ref: (784, 10), b_ref: (1, 10), o_ref: (TB, 10)
    acc = jnp.dot(x_ref[...], w_ref[...], preferred_element_type=jnp.float32)
    o_ref[...] = (acc + b_ref[...]).astype(o_ref.dtype)


def prepare_params(weight, bias, dtype=None):
    """One-time layout fix: nn.Linear (10,784)/(10,) -> (784,10)/(1,10).

    Pass dtype=jnp.bfloat16 to halve HBM weight traffic when the caller also
    produces bf16 activations upstream (do NOT cast x right before the call).
    """
    w_t = weight.T
    b2d = bias.reshape(1, OUT_FEATURES)
    if dtype is not None:
        w_t = w_t.astype(dtype)
    return w_t, b2d


@functools.lru_cache(maxsize=1)
def _batch_dim_semantics():
    """Shard the batch grid axis across both TensorCores on v7x."""
    try:
        kind = jax.devices()[0].device_kind.lower()
    except Exception:  # pragma: no cover - defensive; never expected on TPU
        kind = ""
    if "v7" in kind:
        return (pltpu.CORE_PARALLEL,)
    return ("parallel",)


@functools.partial(jax.jit, static_argnames=("block_b",))
def t0_0_forward(x, w_t, b2d, *, block_b=TB_DEFAULT):
    """Pallas equivalent of T0_0.forward.

    x   : (B, C, H, W) with C*H*W == 784 (f32 or bf16)
    w_t : (784, 10)  -- pre-transposed weight (see prepare_params)
    b2d : (1, 10)    -- pre-reshaped bias
    returns: (B, 10) float32
    """
    B = x.shape[0]
    x_flat = x.reshape(B, -1)                     # glue: torch.flatten(x, 1)
    assert x_flat.shape[1] == IN_FEATURES

    # Batch tile: full B for small batches (full-dim rule), otherwise an
    # 8-multiple tile; Pallas masks the partial last tile.
    tb = B if B < block_b else block_b
    grid = (pl.cdiv(B, tb),)

    in_bytes = jnp.dtype(x_flat.dtype).itemsize
    w_bytes = jnp.dtype(w_t.dtype).itemsize
    cost = pl.CostEstimate(
        flops=2 * B * IN_FEATURES * OUT_FEATURES,
        transcendentals=0,
        bytes_accessed=(B * IN_FEATURES * in_bytes
                        + IN_FEATURES * OUT_FEATURES * w_bytes
                        + OUT_FEATURES * 4
                        + B * OUT_FEATURES * 4),
    )

    return pl.pallas_call(
        _linear_kernel,
        out_shape=jax.ShapeDtypeStruct((B, OUT_FEATURES), jnp.float32),
        grid=grid,
        in_specs=[
            pl.BlockSpec((tb, IN_FEATURES), lambda i: (i, 0)),            # x tile (streamed)
            pl.BlockSpec((IN_FEATURES, OUT_FEATURES), lambda i: (0, 0)),  # weight (resident)
            pl.BlockSpec((1, OUT_FEATURES), lambda i: (0, 0)),            # bias (resident)
        ],
        out_specs=pl.BlockSpec((tb, OUT_FEATURES), lambda i: (i, 0)),
        compiler_params=pltpu.CompilerParams(
            dimension_semantics=_batch_dim_semantics(),
            vmem_limit_bytes=VMEM_LIMIT_BYTES,
        ),
        cost_estimate=cost,
    )(x_flat, w_t, b2d)


def init_params(key):
    # Deterministic init mimicking nn.Linear default (uniform +/- 1/sqrt(fan_in)).
    k_w, k_b = jax.random.split(key)
    bound = 1.0 / (IN_FEATURES ** 0.5)
    weight = jax.random.uniform(
        k_w, (OUT_FEATURES, IN_FEATURES), jnp.float32, -bound, bound
    )
    bias = jax.random.uniform(
        k_b, (OUT_FEATURES,), jnp.float32, -bound, bound
    )
    return weight, bias


if __name__ == "__main__":
    key = jax.random.PRNGKey(0)
    k_x, k_p = jax.random.split(key)

    # Small MNIST-like input: (batch=2, channels=1, 28, 28) -> 784 features.
    x = jax.random.normal(k_x, (2, 1, 28, 28), jnp.float32)
    weight, bias = init_params(k_p)

    # One-time layout prep (hoisted out of the per-call path).
    w_t, b2d = prepare_params(weight, bias)

    out = jax.block_until_ready(t0_0_forward(x, w_t, b2d))

    # Reference check against plain JAX.
    ref = x.reshape(2, -1) @ weight.T + bias
    assert out.shape == (2, OUT_FEATURES)
    assert jnp.allclose(out, ref, atol=1e-5, rtol=1e-5)

    # Larger, non-multiple-of-TB batch to exercise the tiled/partial-block path.
    xb = jax.random.normal(k_x, (2500, 1, 28, 28), jnp.float32)
    outb = jax.block_until_ready(t0_0_forward(xb, w_t, b2d))
    refb = xb.reshape(2500, -1) @ weight.T + bias
    assert outb.shape == (2500, OUT_FEATURES)
    assert jnp.allclose(outb, refb, atol=1e-4, rtol=1e-4)

    print("KERNEL_OK")
</pallas_src>

<mosaic_0001>
module attributes {stable_mosaic.version = 11 : i64} {
  func.func @_linear_kernel(%arg0: i32, %arg1: memref<2x784xf32, #tpu.memory_space<vmem>>, %arg2: memref<784x10xf32, #tpu.memory_space<vmem>>, %arg3: memref<1x10xf32, #tpu.memory_space<vmem>>, %arg4: memref<2x10xf32, #tpu.memory_space<vmem>>) attributes {dimension_semantics = [#tpu.dimension_semantics<parallel>], iteration_bounds = array<i64: 1>, scalar_prefetch = 0 : i64, scratch_operands = 0 : i64, tpu.core_type = #tpu.core_type<tc>, window_params = [{transform_indices = @transform_0, window_bounds = array<i64: 2, 784>}, {pipeline_mode = #tpu.pipeline_mode<synchronous>, transform_indices = @transform_1, window_bounds = array<i64: 784, 10>}, {pipeline_mode = #tpu.pipeline_mode<synchronous>, transform_indices = @transform_2, window_bounds = array<i64: 1, 10>}, {transform_indices = @transform_3, window_bounds = array<i64: 2, 10>}]} {
    %c0 = arith.constant 0 : index
    %c0_0 = arith.constant 0 : index
    %0 = vector.load %arg1[%c0, %c0_0] : memref<2x784xf32, #tpu.memory_space<vmem>>, vector<2x784xf32>
    %c0_1 = arith.constant 0 : index
    %c0_2 = arith.constant 0 : index
    %1 = vector.load %arg2[%c0_1, %c0_2] : memref<784x10xf32, #tpu.memory_space<vmem>>, vector<784x10xf32>
    %cst = arith.constant dense<0.000000e+00> : vector<2x10xf32>
    %2 = tpu.matmul %0, %1, %cst {dimension_numbers = #tpu.dot_dimension_numbers<[1], [0], [0], [1], [0, 0, 1, 1], [], []>} : vector<2x784xf32>, vector<784x10xf32>, vector<2x10xf32> -> vector<2x10xf32>
    %c0_3 = arith.constant 0 : index
    %c0_4 = arith.constant 0 : index
    %3 = vector.load %arg3[%c0_3, %c0_4] : memref<1x10xf32, #tpu.memory_space<vmem>>, vector<1x10xf32>
    %4 = vector.broadcast %3 : vector<1x10xf32> to vector<2x10xf32>
    %5 = arith.addf %2, %4 : vector<2x10xf32>
    %c0_5 = arith.constant 0 : index
    %c0_6 = arith.constant 0 : index
    %6 = vector.load %arg4[%c0_5, %c0_6] : memref<2x10xf32, #tpu.memory_space<vmem>>, vector<2x10xf32>
    tpu.vector_store %arg4[%c0_5, %c0_6], %5 {strides = array<i32>} : memref<2x10xf32, #tpu.memory_space<vmem>>, vector<2x10xf32>,
    return
  }
  func.func @transform_0(%arg0: i32) -> (i32, i32) {
    %c0_i32 = arith.constant 0 : i32
    %c0_i32_0 = arith.constant 0 : i32
    return %arg0, %c0_i32 : i32, i32
  }
  func.func @transform_1(%arg0: i32) -> (i32, i32) {
    %c0_i32 = arith.constant 0 : i32
    %c0_i32_0 = arith.constant 0 : i32
    %c0_i32_1 = arith.constant 0 : i32
    return %c0_i32, %c0_i32_0 : i32, i32
  }
  func.func @transform_2(%arg0: i32) -> (i32, i32) {
    %c0_i32 = arith.constant 0 : i32
    %c0_i32_0 = arith.constant 0 : i32
    %c0_i32_1 = arith.constant 0 : i32
    return %c0_i32, %c0_i32_0 : i32, i32
  }
  func.func @transform_3(%arg0: i32) -> (i32, i32) {
    %c0_i32 = arith.constant 0 : i32
    %c0_i32_0 = arith.constant 0 : i32
    return %arg0, %c0_i32 : i32, i32
  }
}

</mosaic_0001>

<llo_original>
// kernel: t0_0_forward.1
$region0: #{t0_0_forward.1}
  #allocation0 [shape = 'u32[]', space=smem, size = 0x4, offset = 0x4, fixed_abs, tag = 'smem constant byte address 0x4 - core index']
  #allocation1 [shape = 'u32[144,128]{1,0:T(1,128)}', space=vmem, size = 0x12000, scoped, tag = 'internal scratch']
  %s0 = inlined_call_operand.vmem [shape: f32[2,784], index: 0, kind: input, shape index: {}]
  %s1 = inlined_call_operand.vmem [shape: f32[784,10], index: 1, kind: input, shape index: {}]
  %s2 = inlined_call_operand.vmem [shape: f32[1,10], index: 2, kind: input, shape index: {}]
  %s3 = inlined_call_operand.hbm [shape: f32[2,10], index: 3, kind: output, shape index: {}]
  %s4 = sld [smem:[#allocation0]]
  $region22: #{t0_0_forward.1} parent=0
    _
  %s6 = ssub.s32 1, %s4
  %s7 = scalar_select 0, %s6, %s4
  $region1: #{t0_0_forward.1} parent=0
    #allocation2 [shape = 'u8[1024]{0}', space=vmem, size = 0x400, scoped, tag = 'output window, operand 0, single buffered']
    #allocation3 [shape = 's32[1]{0}', space=sflag, size = 0x4, scoped, tag = 'scoped memory for t0_0_forward.1']
    %8 = vsyncpa [#allocation3], 0
    // Predicated region
    $region2: #{t0_0_forward.1} parent=1 // pred_check
      _
    $region3: #{t0_0_forward.1} parent=1 // pred_check_branch
      %10 = sbr.rel (0) target = $region5
    $region4: #{t0_0_forward.1} parent=1 // pred_region
      _
    $region5: #{t0_0_forward.1} parent=1 // pred_fallthru
      _
    // Predicated region
    $region6: #{t0_0_forward.1} parent=1 // pred_check
      _
    $region7: #{t0_0_forward.1} parent=1 // pred_check_branch
      %12 = sbr.rel (0) target = $region9
    $region8: #{t0_0_forward.1} parent=1 // pred_region
      _
    $region9: #{t0_0_forward.1} parent=1 // pred_fallthru
      _
    // Predicated region
    $region10: #{t0_0_forward.1} parent=1 // pred_check
      _
    $region11: #{t0_0_forward.1} parent=1 // pred_check_branch
      %14 = sbr.rel (0) target = $region13
    $region12: #{t0_0_forward.1} parent=1 // pred_region
      _
    $region13: #{t0_0_forward.1} parent=1 // pred_fallthru
      _
    %v15 = vld [vmem:[%s0] sm:$0xff]
    %v16 = vld [vmem:[%s0 + $0x8] sm:$0x3f]
    %v17 = vld [vmem:[%s1] sm:$0xff]
    %v18 = vld [vmem:[%s1 + $0x8] sm:$0xff]
    %v19 = vld [vmem:[%s1 + $0x10] sm:$0xff]
    %v20 = vld [vmem:[%s1 + $0x18] sm:$0xff]
    %v21 = vld [vmem:[%s1 + $0x20] sm:$0xff]
    %v22 = vld [vmem:[%s1 + $0x28] sm:$0xff]
    %v23 = vld [vmem:[%s1 + $0x30] sm:$0xff]
    %v24 = vld [vmem:[%s1 + $0x38] sm:$0xff]
    %v25 = vld [vmem:[%s1 + $0x40] sm:$0xff]
    %v26 = vld [vmem:[%s1 + $0x48] sm:$0xff]
    %v27 = vld [vmem:[%s1 + $0x50] sm:$0xff]
    %v28 = vld [vmem:[%s1 + $0x58] sm:$0xff]
    %v29 = vld [vmem:[%s1 + $0x60] sm:$0xff]
    %v30 = vld [vmem:[%s1 + $0x68] sm:$0xff]
    %v31 = vld [vmem:[%s1 + $0x70] sm:$0xff]
    %v32 = vld [vmem:[%s1 + $0x78] sm:$0xff]
    %v33 = vld [vmem:[%s1 + $0x80] sm:$0xff]
    %v34 = vld [vmem:[%s1 + $0x88] sm:$0xff]
    %v35 = vld [vmem:[%s1 + $0x90] sm:$0xff]
    %v36 = vld [vmem:[%s1 + $0x98] sm:$0xff]
    %v37 = vld [vmem:[%s1 + $0xa0] sm:$0xff]
    %v38 = vld [vmem:[%s1 + $0xa8] sm:$0xff]
    %v39 = vld [vmem:[%s1 + $0xb0] sm:$0xff]
    %v40 = vld [vmem:[%s1 + $0xb8] sm:$0xff]
    %v41 = vld [vmem:[%s1 + $0xc0] sm:$0xff]
    %v42 = vld [vmem:[%s1 + $0xc8] sm:$0xff]
    %v43 = vld [vmem:[%s1 + $0xd0] sm:$0xff]
    %v44 = vld [vmem:[%s1 + $0xd8] sm:$0xff]
    %v45 = vld [vmem:[%s1 + $0xe0] sm:$0xff]
    %v46 = vld [vmem:[%s1 + $0xe8] sm:$0xff]
    %v47 = vld [vmem:[%s1 + $0xf0] sm:$0xff]
    %v48 = vld [vmem:[%s1 + $0xf8] sm:$0xff]
    %v49 = vld [vmem:[%s1 + $0x100] sm:$0xff]
    %v50 = vld [vmem:[%s1 + $0x108] sm:$0xff]
    %v51 = vld [vmem:[%s1 + $0x110] sm:$0xff]
    %v52 = vld [vmem:[%s1 + $0x118] sm:$0xff]
    %v53 = vld [vmem:[%s1 + $0x120] sm:$0xff]
    %v54 = vld [vmem:[%s1 + $0x128] sm:$0xff]
    %v55 = vld [vmem:[%s1 + $0x130] sm:$0xff]
    %v56 = vld [vmem:[%s1 + $0x138] sm:$0xff]
    %v57 = vld [vmem:[%s1 + $0x140] sm:$0xff]
    %v58 = vld [vmem:[%s1 + $0x148] sm:$0xff]
    %v59 = vld [vmem:[%s1 + $0x150] sm:$0xff]
    %v60 = vld [vmem:[%s1 + $0x158] sm:$0xff]
    %v61 = vld [vmem:[%s1 + $0x160] sm:$0xff]
    %v62 = vld [vmem:[%s1 + $0x168] sm:$0xff]
    %v63 = vld [vmem:[%s1 + $0x170] sm:$0xff]
    %v64 = vld [vmem:[%s1 + $0x178] sm:$0xff]
    %v65 = vld [vmem:[%s1 + $0x180] sm:$0xff]
    %v66 = vld [vmem:[%s1 + $0x188] sm:$0xff]
    %v67 = vld [vmem:[%s1 + $0x190] sm:$0xff]
    %v68 = vld [vmem:[%s1 + $0x198] sm:$0xff]
    %v69 = vld [vmem:[%s1 + $0x1a0] sm:$0xff]
    %v70 = vld [vmem:[%s1 + $0x1a8] sm:$0xff]
    %v71 = vld [vmem:[%s1 + $0x1b0] sm:$0xff]
    %v72 = vld [vmem:[%s1 + $0x1b8] sm:$0xff]
    %v73 = vld [vmem:[%s1 + $0x1c0] sm:$0xff]
    %v74 = vld [vmem:[%s1 + $0x1c8] sm:$0xff]
    %v75 = vld [vmem:[%s1 + $0x1d0] sm:$0xff]
    %v76 = vld [vmem:[%s1 + $0x1d8] sm:$0xff]
    %v77 = vld [vmem:[%s1 + $0x1e0] sm:$0xff]
    %v78 = vld [vmem:[%s1 + $0x1e8] sm:$0xff]
    %v79 = vld [vmem:[%s1 + $0x1f0] sm:$0xff]
    %v80 = vld [vmem:[%s1 + $0x1f8] sm:$0xff]
    %v81 = vld [vmem:[%s1 + $0x200] sm:$0xff]
    %v82 = vld [vmem:[%s1 + $0x208] sm:$0xff]
    %v83 = vld [vmem:[%s1 + $0x210] sm:$0xff]
    %v84 = vld [vmem:[%s1 + $0x218] sm:$0xff]
    %v85 = vld [vmem:[%s1 + $0x220] sm:$0xff]
    %v86 = vld [vmem:[%s1 + $0x228] sm:$0xff]
    %v87 = vld [vmem:[%s1 + $0x230] sm:$0xff]
    %v88 = vld [vmem:[%s1 + $0x238] sm:$0xff]
    %v89 = vld [vmem:[%s1 + $0x240] sm:$0xff]
    %v90 = vld [vmem:[%s1 + $0x248] sm:$0xff]
    %v91 = vld [vmem:[%s1 + $0x250] sm:$0xff]
    %v92 = vld [vmem:[%s1 + $0x258] sm:$0xff]
    %v93 = vld [vmem:[%s1 + $0x260] sm:$0xff]
    %v94 = vld [vmem:[%s1 + $0x268] sm:$0xff]
    %v95 = vld [vmem:[%s1 + $0x270] sm:$0xff]
    %v96 = vld [vmem:[%s1 + $0x278] sm:$0xff]
    %v97 = vld [vmem:[%s1 + $0x280] sm:$0xff]
    %v98 = vld [vmem:[%s1 + $0x288] sm:$0xff]
    %v99 = vld [vmem:[%s1 + $0x290] sm:$0xff]
    %v100 = vld [vmem:[%s1 + $0x298] sm:$0xff]
    %v101 = vld [vmem:[%s1 + $0x2a0] sm:$0xff]
    %v102 = vld [vmem:[%s1 + $0x2a8] sm:$0xff]
    %v103 = vld [vmem:[%s1 + $0x2b0] sm:$0xff]
    %v104 = vld [vmem:[%s1 + $0x2b8] sm:$0xff]
    %v105 = vld [vmem:[%s1 + $0x2c0] sm:$0xff]
    %v106 = vld [vmem:[%s1 + $0x2c8] sm:$0xff]
    %v107 = vld [vmem:[%s1 + $0x2d0] sm:$0xff]
    %v108 = vld [vmem:[%s1 + $0x2d8] sm:$0xff]
    %v109 = vld [vmem:[%s1 + $0x2e0] sm:$0xff]
    %v110 = vld [vmem:[%s1 + $0x2e8] sm:$0xff]
    %v111 = vld [vmem:[%s1 + $0x2f0] sm:$0xff]
    %v112 = vld [vmem:[%s1 + $0x2f8] sm:$0xff]
    %v113 = vld [vmem:[%s1 + $0x300] sm:$0xff]
    %v114 = vld [vmem:[%s1 + $0x308] sm:$0xff]
    %v115 = vld [vmem:[%s2] sm:$0x1]
    %v117 = vlaneseq
    %v118 = vshrl.u32 %v117, 7
    %v119 = vsub.s32 0, %v118
    %v120 = vrot.slane %v115, %v119
    %v124 = vcombine.high %v15, %v15
    %v126 = vunpack.c.l.s4 1983009808
    %v127 = vunpack.c.0.s8 %v126
    %v128 = vlaneseq
    %v129 = vshrl.u32 %v128, 7
    %v130 = vsub.s32 %v127, %v129
    %v131 = vrot.slane %v15, %v130
    %v133 = vunpack.c.l.s4 1983009808
    %v134 = vunpack.c.0.s8 %v133
    %v135 = vlaneseq
    %v136 = vshrl.u32 %v135, 7
    %v137 = vsub.s32 %v134, %v136
    %v138 = vrot.slane %v124, %v137
    %v139 = vcombine.high %v131, %v131
    %v140 = vcombine.high %v138, %v138
    %v141 = vcombine.high %v16, %v16
    %v143 = vunpack.c.l.s4 1983009808
    %v144 = vunpack.c.0.s8 %v143
    %v145 = vlaneseq
    %v146 = vshrl.u32 %v145, 7
    %v147 = vsub.s32 %v144, %v146
    %v148 = vrot.slane %v16, %v147
    %v150 = vunpack.c.l.s4 1983009808
    %v151 = vunpack.c.0.s8 %v150
    %v152 = vlaneseq
    %v153 = vshrl.u32 %v152, 7
    %v154 = vsub.s32 %v151, %v153
    %v155 = vrot.slane %v141, %v154
    %v156 = vcombine.high %v148, %v148
    %vm163 = vcmask 130048
    %v164 = vsel %vm163, %v155, 0
    %166 = vmatprep.subr.mxu0 0.0
    %167 = vmatpush1.msra.mxu0 %v17
    %168 = vmatprep.subr.mxu0 0.0
    %169 = vmatpush1.msra.mxu0 %v18
    %170 = vmatprep.subr.mxu0 0.0
    %171 = vmatpush1.msra.mxu0 %v19
    %172 = vmatprep.subr.mxu0 0.0
    %173 = vmatpush1.msra.mxu0 %v20
    %174 = vmatprep.subr.mxu0 0.0
    %175 = vmatpush1.msra.mxu0 %v21
    %176 = vmatprep.subr.mxu0 0.0
    %177 = vmatpush1.msra.mxu0 %v22
    %178 = vmatprep.subr.mxu0 0.0
    %179 = vmatpush1.msra.mxu0 %v23
    %180 = vmatprep.subr.mxu0 0.0
    %181 = vmatpush1.msra.mxu0 %v24
    %182 = vmatprep.subr.mxu0 0.0
    %183 = vmatpush1.msra.mxu0 %v25
    %184 = vmatprep.subr.mxu0 0.0
    %185 = vmatpush1.msra.mxu0 %v26
    %186 = vmatprep.subr.mxu0 0.0
    %187 = vmatpush1.msra.mxu0 %v27
    %188 = vmatprep.subr.mxu0 0.0
    %189 = vmatpush1.msra.mxu0 %v28
    %190 = vmatprep.subr.mxu0 0.0
    %191 = vmatpush1.msra.mxu0 %v29
    %192 = vmatprep.subr.mxu0 0.0
    %193 = vmatpush1.msra.mxu0 %v30
    %194 = vmatprep.subr.mxu0 0.0
    %195 = vmatpush1.msra.mxu0 %v31
    %196 = vmatprep.subr.mxu0 0.0
    %197 = vmatpush1.msra.mxu0 %v32
    %198 = vmatprep.subr.mxu0 0.0
    %199 = vmatpush1.msra.mxu0 %v33
    %200 = vmatprep.subr.mxu0 0.0
    %201 = vmatpush1.msra.mxu0 %v34
    %202 = vmatprep.subr.mxu0 0.0
    %203 = vmatpush1.msra.mxu0 %v35
    %204 = vmatprep.subr.mxu0 0.0
    %205 = vmatpush1.msra.mxu0 %v36
    %206 = vmatprep.subr.mxu0 0.0
    %207 = vmatpush1.msra.mxu0 %v37
    %208 = vmatprep.subr.mxu0 0.0
    %209 = vmatpush1.msra.mxu0 %v38
    %210 = vmatprep.subr.mxu0 0.0
    %211 = vmatpush1.msra.mxu0 %v39
    %212 = vmatprep.subr.mxu0 0.0
    %213 = vmatpush1.msra.mxu0 %v40
    %214 = vmatprep.subr.mxu0 0.0
    %215 = vmatpush1.msra.mxu0 %v41
    %216 = vmatprep.subr.mxu0 0.0
    %217 = vmatpush1.msra.mxu0 %v42
    %218 = vmatprep.subr.mxu0 0.0
    %219 = vmatpush1.msra.mxu0 %v43
    %220 = vmatprep.subr.mxu0 0.0
    %221 = vmatpush1.msra.mxu0 %v44
    %222 = vmatprep.subr.mxu0 0.0
    %223 = vmatpush1.msra.mxu0 %v45
    %224 = vmatprep.subr.mxu0 0.0
    %225 = vmatpush1.msra.mxu0 %v46
    %226 = vmatprep.subr.mxu0 0.0
    %227 = vmatpush1.msra.mxu0 %v47
    %228 = vmatprep.subr.mxu0 0.0
    %229 = vmatpush1.msra.mxu0 %v48
    %230 = vmatprep.mubr.f32.mxu0 %v139
    %231 = vmatmul.mubr.f32.gmra.mrb[0].mxu0 %v131
    %v232 = vpop.f32.mrb[0].mxu0
    %v233 = vadd.f32 %v120, %v232
    %v234 = vpop.f32.mrb[0].mxu0
    %235 = vdwg.mxu0
    %236 = vmatprep.subr.mxu0 0.0
    %237 = vmatpush1.msra.mxu0 %v49
    %238 = vmatprep.subr.mxu0 0.0
    %239 = vmatpush1.msra.mxu0 %v50
    %240 = vmatprep.subr.mxu0 0.0
    %241 = vmatpush1.msra.mxu0 %v51
    %242 = vmatprep.subr.mxu0 0.0
    %243 = vmatpush1.msra.mxu0 %v52
    %244 = vmatprep.subr.mxu0 0.0
    %245 = vmatpush1.msra.mxu0 %v53
    %246 = vmatprep.subr.mxu0 0.0
    %247 = vmatpush1.msra.mxu0 %v54
    %248 = vmatprep.subr.mxu0 0.0
    %249 = vmatpush1.msra.mxu0 %v55
    %250 = vmatprep.subr.mxu0 0.0
    %251 = vmatpush1.msra.mxu0 %v56
    %252 = vmatprep.subr.mxu0 0.0
    %253 = vmatpush1.msra.mxu0 %v57
    %254 = vmatprep.subr.mxu0 0.0
    %255 = vmatpush1.msra.mxu0 %v58
    %256 = vmatprep.subr.mxu0 0.0
    %257 = vmatpush1.msra.mxu0 %v59
    %258 = vmatprep.subr.mxu0 0.0
    %259 = vmatpush1.msra.mxu0 %v60
    %260 = vmatprep.subr.mxu0 0.0
    %261 = vmatpush1.msra.mxu0 %v61
    %262 = vmatprep.subr.mxu0 0.0
    %263 = vmatpush1.msra.mxu0 %v62
    %264 = vmatprep.subr.mxu0 0.0
    %265 = vmatpush1.msra.mxu0 %v63
    %266 = vmatprep.subr.mxu0 0.0
    %267 = vmatpush1.msra.mxu0 %v64
    %268 = vmatprep.subr.mxu0 0.0
    %269 = vmatpush1.msra.mxu0 %v65
    %270 = vmatprep.subr.mxu0 0.0
    %271 = vmatpush1.msra.mxu0 %v66
    %272 = vmatprep.subr.mxu0 0.0
    %273 = vmatpush1.msra.mxu0 %v67
    %274 = vmatprep.subr.mxu0 0.0
    %275 = vmatpush1.msra.mxu0 %v68
    %276 = vmatprep.subr.mxu0 0.0
    %277 = vmatpush1.msra.mxu0 %v69
    %278 = vmatprep.subr.mxu0 0.0
    %279 = vmatpush1.msra.mxu0 %v70
    %280 = vmatprep.subr.mxu0 0.0
    %281 = vmatpush1.msra.mxu0 %v71
    %282 = vmatprep.subr.mxu0 0.0
    %283 = vmatpush1.msra.mxu0 %v72
    %284 = vmatprep.subr.mxu0 0.0
    %285 = vmatpush1.msra.mxu0 %v73
    %286 = vmatprep.subr.mxu0 0.0
    %287 = vmatpush1.msra.mxu0 %v74
    %288 = vmatprep.subr.mxu0 0.0
    %289 = vmatpush1.msra.mxu0 %v75
    %290 = vmatprep.subr.mxu0 0.0
    %291 = vmatpush1.msra.mxu0 %v76
    %292 = vmatprep.subr.mxu0 0.0
    %293 = vmatpush1.msra.mxu0 %v77
    %294 = vmatprep.subr.mxu0 0.0
    %295 = vmatpush1.msra.mxu0 %v78
    %296 = vmatprep.subr.mxu0 0.0
    %297 = vmatpush1.msra.mxu0 %v79
    %298 = vmatprep.subr.mxu0 0.0
    %299 = vmatpush1.msra.mxu0 %v80
    %300 = vmatprep.mubr.f32.mxu0 %v140
    %301 = vmatmul.mubr.f32.gmra.mrb[0].mxu0 %v138
    %v302 = vpop.f32.mrb[0].mxu0
    %v303 = vadd.f32 %v233, %v302
    %v304 = vpop.f32.mrb[0].mxu0
    %305 = vdwg.mxu0
    %306 = vmatprep.subr.mxu0 0.0
    %307 = vmatpush1.msra.mxu0 %v81
    %308 = vmatprep.subr.mxu0 0.0
    %309 = vmatpush1.msra.mxu0 %v82
    %310 = vmatprep.subr.mxu0 0.0
    %311 = vmatpush1.msra.mxu0 %v83
    %312 = vmatprep.subr.mxu0 0.0
    %313 = vmatpush1.msra.mxu0 %v84
    %314 = vmatprep.subr.mxu0 0.0
    %315 = vmatpush1.msra.mxu0 %v85
    %316 = vmatprep.subr.mxu0 0.0
    %317 = vmatpush1.msra.mxu0 %v86
    %318 = vmatprep.subr.mxu0 0.0
    %319 = vmatpush1.msra.mxu0 %v87
    %320 = vmatprep.subr.mxu0 0.0
    %321 = vmatpush1.msra.mxu0 %v88
    %322 = vmatprep.subr.mxu0 0.0
    %323 = vmatpush1.msra.mxu0 %v89
    %324 = vmatprep.subr.mxu0 0.0
    %325 = vmatpush1.msra.mxu0 %v90
    %326 = vmatprep.subr.mxu0 0.0
    %327 = vmatpush1.msra.mxu0 %v91
    %328 = vmatprep.subr.mxu0 0.0
    %329 = vmatpush1.msra.mxu0 %v92
    %330 = vmatprep.subr.mxu0 0.0
    %331 = vmatpush1.msra.mxu0 %v93
    %332 = vmatprep.subr.mxu0 0.0
    %333 = vmatpush1.msra.mxu0 %v94
    %334 = vmatprep.subr.mxu0 0.0
    %335 = vmatpush1.msra.mxu0 %v95
    %336 = vmatprep.subr.mxu0 0.0
    %337 = vmatpush1.msra.mxu0 %v96
    %338 = vmatprep.subr.mxu0 0.0
    %339 = vmatpush1.msra.mxu0 %v97
    %340 = vmatprep.subr.mxu0 0.0
    %341 = vmatpush1.msra.mxu0 %v98
    %342 = vmatprep.subr.mxu0 0.0
    %343 = vmatpush1.msra.mxu0 %v99
    %344 = vmatprep.subr.mxu0 0.0
    %345 = vmatpush1.msra.mxu0 %v100
    %346 = vmatprep.subr.mxu0 0.0
    %347 = vmatpush1.msra.mxu0 %v101
    %348 = vmatprep.subr.mxu0 0.0
    %349 = vmatpush1.msra.mxu0 %v102
    %350 = vmatprep.subr.mxu0 0.0
    %351 = vmatpush1.msra.mxu0 %v103
    %352 = vmatprep.subr.mxu0 0.0
    %353 = vmatpush1.msra.mxu0 %v104
    %354 = vmatprep.subr.mxu0 0.0
    %355 = vmatpush1.msra.mxu0 %v105
    %356 = vmatprep.subr.mxu0 0.0
    %357 = vmatpush1.msra.mxu0 %v106
    %358 = vmatprep.subr.mxu0 0.0
    %359 = vmatpush1.msra.mxu0 %v107
    %360 = vmatprep.subr.mxu0 0.0
    %361 = vmatpush1.msra.mxu0 %v108
    %362 = vmatprep.subr.mxu0 0.0
    %363 = vmatpush1.msra.mxu0 %v109
    %364 = vmatprep.subr.mxu0 0.0
    %365 = vmatpush1.msra.mxu0 %v110
    %366 = vmatprep.subr.mxu0 0.0
    %367 = vmatpush1.msra.mxu0 %v111
    %368 = vmatprep.subr.mxu0 0.0
    %369 = vmatpush1.msra.mxu0 %v112
    %370 = vmatprep.mubr.f32.mxu0 %v156
    %371 = vmatmul.mubr.f32.gmra.mrb[0].mxu0 %v148
    %v372 = vpop.f32.mrb[0].mxu0
    %v373 = vadd.f32 %v303, %v372
    %v374 = vpop.f32.mrb[0].mxu0
    %375 = vdwg.mxu0
    %376 = vmatprep.subr.mxu0 0.0
    %377 = vmatpush1.msra.mxu0 %v113
    %378 = vmatprep.subr.mxu0 0.0
    %379 = vmatpush1.msra.mxu0 %v114
    %380 = vmatprep.subr.mxu0 0.0
    %381 = vmatpush1.msra.mxu0 0.0
    %382 = vmatprep.subr.mxu0 0.0
    %383 = vmatpush1.msra.mxu0 0.0
    %384 = vmatprep.subr.mxu0 0.0
    %385 = vmatpush1.msra.mxu0 0.0
    %386 = vmatprep.subr.mxu0 0.0
    %387 = vmatpush1.msra.mxu0 0.0
    %388 = vmatprep.subr.mxu0 0.0
    %389 = vmatpush1.msra.mxu0 0.0
    %390 = vmatprep.subr.mxu0 0.0
    %391 = vmatpush1.msra.mxu0 0.0
    %392 = vmatprep.subr.mxu0 0.0
    %393 = vmatpush1.msra.mxu0 0.0
    %394 = vmatprep.subr.mxu0 0.0
    %395 = vmatpush1.msra.mxu0 0.0
    %396 = vmatprep.subr.mxu0 0.0
    %397 = vmatpush1.msra.mxu0 0.0
    %398 = vmatprep.subr.mxu0 0.0
    %399 = vmatpush1.msra.mxu0 0.0
    %400 = vmatprep.subr.mxu0 0.0
    %401 = vmatpush1.msra.mxu0 0.0
    %402 = vmatprep.subr.mxu0 0.0
    %403 = vmatpush1.msra.mxu0 0.0
    %404 = vmatprep.subr.mxu0 0.0
    %405 = vmatpush1.msra.mxu0 0.0
    %406 = vmatprep.subr.mxu0 0.0
    %407 = vmatpush1.msra.mxu0 0.0
    %408 = vmatprep.subr.mxu0 0.0
    %409 = vmatpush1.msra.mxu0 0.0
    %410 = vmatprep.subr.mxu0 0.0
    %411 = vmatpush1.msra.mxu0 0.0
    %412 = vmatprep.subr.mxu0 0.0
    %413 = vmatpush1.msra.mxu0 0.0
    %414 = vmatprep.subr.mxu0 0.0
    %415 = vmatpush1.msra.mxu0 0.0
    %416 = vmatprep.subr.mxu0 0.0
    %417 = vmatpush1.msra.mxu0 0.0
    %418 = vmatprep.subr.mxu0 0.0
    %419 = vmatpush1.msra.mxu0 0.0
    %420 = vmatprep.subr.mxu0 0.0
    %421 = vmatpush1.msra.mxu0 0.0
    %422 = vmatprep.subr.mxu0 0.0
    %423 = vmatpush1.msra.mxu0 0.0
    %424 = vmatprep.subr.mxu0 0.0
    %425 = vmatpush1.msra.mxu0 0.0
    %426 = vmatprep.subr.mxu0 0.0
    %427 = vmatpush1.msra.mxu0 0.0
    %428 = vmatprep.subr.mxu0 0.0
    %429 = vmatpush1.msra.mxu0 0.0
    %430 = vmatprep.subr.mxu0 0.0
    %431 = vmatpush1.msra.mxu0 0.0
    %432 = vmatprep.subr.mxu0 0.0
    %433 = vmatpush1.msra.mxu0 0.0
    %434 = vmatprep.subr.mxu0 0.0
    %435 = vmatpush1.msra.mxu0 0.0
    %436 = vmatprep.subr.mxu0 0.0
    %437 = vmatpush1.msra.mxu0 0.0
    %438 = vmatprep.subr.mxu0 0.0
    %439 = vmatpush1.msra.mxu0 0.0
    %440 = vmatprep.mubr.f32.mxu0 0.0
    %441 = vmatmul.mubr.f32.gmra.mrb[0].mxu0 %v164
    %v442 = vpop.f32.mrb[0].mxu0
    %v443 = vadd.f32 %v373, %v442
    %v444 = vpop.f32.mrb[0].mxu0
    %445 = vdwg.mxu0
    %vm446 = vcmask 74752
    %447 = vst.msk [vmem:[#allocation2] sm:$0x3] %vm446, %v443
    // Predicated region
    $region14: #{t0_0_forward.1} parent=1 // pred_check
      _
    $region15: #{t0_0_forward.1} parent=1 // pred_check_branch
      %449 = sbr.rel (0) target = $region17
    $region16: #{t0_0_forward.1} parent=1 // pred_region
      %s451 = ssub.s32 32, 32
      %452 = vsyncadd [#allocation3], %s451
      %s454 = sshll.u32 [#allocation2], 4
      %s455 = int_to_ptr.vmem [resolvable:$true] %s454
      %457 = dma.vmem_to_hbm [thread:$0]  %s455, 32, %s3, [#allocation3]
    $region17: #{t0_0_forward.1} parent=1 // pred_fallthru
      _
    // Predicated region
    $region18: #{t0_0_forward.1} parent=1 // pred_check
      _
    $region19: #{t0_0_forward.1} parent=1 // pred_check_branch
      %459 = sbr.rel (0) target = $region21
    $region20: #{t0_0_forward.1} parent=1 // pred_region
      %460 = dma.done [#allocation3], 32
    $region21: #{t0_0_forward.1} parent=1 // pred_fallthru
      _
    %461 = vsyncpa [#allocation3], 1

</llo_original>
